<compile_context>
chip_gen: v7x
topology: tpu7x:2x2x1
jax: 0.10.0
libtpu: 0.0.40
codegen_flags: <defaults>
</compile_context>

<pallas_src>
import functools

import jax
import jax.numpy as jnp
from jax.experimental import pallas as pl
from jax.experimental.pallas import tpu as pltpu

_LANE = 128
_MIB = 1024 * 1024


def _tpu_vmem_info():
    """Returns (num_tensorcores, scoped_vmem_limit_bytes), generation-aware."""
    try:
        cap = int(pltpu.get_tpu_info().vmem_capacity_bytes)
    except Exception:
        cap = 64 * _MIB  # assume the tightest chip (v7x) if query unavailable
    if cap >= 96 * _MIB:
        # v5e / v6e: 128 MiB physical VMEM, single TensorCore. Raise the scoped
        # limit well above the 16/32 MiB defaults so big per-step tiles fit.
        return 1, 64 * _MIB
    # v7x: 64 MiB physical per TensorCore, two TensorCores per chip.
    return 2, 40 * _MIB


def _min_cblk(itemsize):
    # Packed-sublane minimum: 8 for f32, 16 for bf16, 32 for int8/fp8.
    return max(8, (8 * 4) // itemsize)


def _pad_lanes(n):
    # Lane-tail cost: last dim pads to a multiple of 128 in VMEM; budget with
    # the padded width, not the raw HW.
    return -(-n // _LANE) * _LANE


# --------------------------------------------------------------------------
# Primary fused kernel: one grid step owns full (N, HW) for a channel tile.
# --------------------------------------------------------------------------
def _bn_add_fused_kernel(x_ref, r_ref, gamma_ref, beta_ref, o_ref, *, eps):
    # x/r/o: (N, cblk, HW); gamma/beta: (1, cblk, 1)
    m = x_ref.shape[0] * x_ref.shape[2]  # N * H * W
    inv_m = 1.0 / m
    # Phase 1: single-sweep statistics, f32 accumulation. Training-mode
    # BatchNorm2d normalizes with the *biased* variance; clamp >= 0 for safety.
    x32 = x_ref[...].astype(jnp.float32)
    s1 = jnp.sum(x32, axis=(0, 2), keepdims=True)        # (1, cblk, 1)
    s2 = jnp.sum(x32 * x32, axis=(0, 2), keepdims=True)  # (1, cblk, 1)
    mean = s1 * inv_m
    var = jnp.maximum(s2 * inv_m - mean * mean, 0.0)
    inv_std = jax.lax.rsqrt(var + eps)
    scale = gamma_ref[...].astype(jnp.float32) * inv_std        # (1, cblk, 1)
    shift = beta_ref[...].astype(jnp.float32) - mean * scale    # (1, cblk, 1)
    # Phase 2: re-read the VMEM-resident tiles (3 vld/cycle, ~free) so the
    # phase-1 f32 upcast need not stay live across both phases.
    y = (x_ref[...].astype(jnp.float32) * scale + shift
         + r_ref[...].astype(jnp.float32))
    o_ref[...] = y.astype(o_ref.dtype)
    # TODO(synk): for bf16 inputs on v6e/v7x, do this epilogue in bf16 (cast
    # scale/shift once) to halve VPU work / temp footprint; keep f32 on v5e.


# --------------------------------------------------------------------------
# Fallback pass 1: per-channel sum / sum-of-squares, HW-tiled reduction.
# --------------------------------------------------------------------------
def _bn_stats_kernel(x_ref, s1_ref, s2_ref, *, hw_total, hw_blk):
    hw_i = pl.program_id(1)

    @pl.when(hw_i == 0)
    def _():
        s1_ref[...] = jnp.zeros_like(s1_ref)
        s2_ref[...] = jnp.zeros_like(s2_ref)

    x32 = x_ref[...].astype(jnp.float32)
    # Mask the lane tail of the final (possibly partial) HW chunk: OOB block
    # padding is garbage on load and must not pollute the reduction.
    col = jax.lax.broadcasted_iota(jnp.int32, x32.shape, 2)
    valid = (hw_i * hw_blk + col) < hw_total
    x32 = jnp.where(valid, x32, 0.0)
    s1_ref[...] += jnp.sum(x32, axis=(0, 2), keepdims=True)
    s2_ref[...] += jnp.sum(x32 * x32, axis=(0, 2), keepdims=True)


# --------------------------------------------------------------------------
# Fallback pass 2: normalize + residual add with precomputed scale/shift.
# --------------------------------------------------------------------------
def _bn_apply_kernel(x_ref, r_ref, scale_ref, shift_ref, o_ref):
    y = (x_ref[...].astype(jnp.float32) * scale_ref[...] + shift_ref[...]
         + r_ref[...].astype(jnp.float32))
    o_ref[...] = y.astype(o_ref.dtype)


# --------------------------------------------------------------------------
# Tiling heuristics
# --------------------------------------------------------------------------
def _pick_cblk_fused(C, N, hw_pad, itemsize, budget, num_tc):
    """Channel tile for the fused single-pass kernel, or None if even the
    smallest legal full-HW tile exceeds the VMEM budget."""
    min_c = _min_cblk(itemsize)
    # Per grid step: 3 arrays (x, r, o) x 2 pipeline buffers in native dtype,
    # plus ~3 f32 in-kernel temporaries (upcast, x*x, y) of one block.
    per_chan = N * hw_pad * (3 * 2 * itemsize + 3 * 4)

    def legal(c):
        return c >= 1 and C % c == 0 and (c == C or c % min_c == 0)

    cblk = None
    for cand in sorted({d for d in range(1, C + 1) if legal(d)}, reverse=True):
        if cand * per_chan <= budget:
            cblk = cand
            break
    if cblk is None:
        return None

    def steps_ok(s):
        if num_tc >= 2:
            # v7x: even split across the two TensorCores, >= 2 steps per core.
            return s >= 4 and s % 2 == 0
        # Single TC (v5e/v6e): only DMA/compute pipeline overlap matters.
        return s >= 3

    while not steps_ok(C // cblk):
        half = cblk // 2
        if not legal(half):
            break
        cblk = half
    return cblk


def _fallback_cblk(C, N, itemsize, budget):
    min_c = _min_cblk(itemsize)
    legal = [d for d in range(1, C + 1)
             if C % d == 0 and (d == C or d % min_c == 0)]
    # Require at least a 128-lane working set of the apply pass to fit.
    fits = [d for d in legal
            if N * d * _LANE * (3 * 2 * itemsize + 3 * 4) <= budget]
    small = [d for d in fits if d <= 128]
    if small:
        return max(small)
    if fits:
        return min(fits)
    return min(legal)


def _pick_hw_blk(N, HW, cblk, itemsize, budget, arrays, temps_f32):
    """Largest multiple-of-128 HW chunk whose per-step working set fits."""
    per_lane = N * cblk * (arrays * 2 * itemsize + temps_f32 * 4)
    max_blk = (budget // per_lane) // _LANE * _LANE
    max_blk = max(_LANE, int(max_blk))
    return int(min(_pad_lanes(HW), max_blk))


# --------------------------------------------------------------------------
# Wrapper
# --------------------------------------------------------------------------
def batchnorm_add(x189, x182, gamma, beta, *, eps=1e-5):
    """BatchNorm2d(x189) (training-mode batch stats, affine) + x182, NCHW."""
    N, C, H, W = x189.shape
    HW = H * W
    dtype = x189.dtype
    itemsize = jnp.dtype(dtype).itemsize

    # NCHW consumed natively; these reshapes move no data.
    x3 = x189.reshape(N, C, HW)
    r3 = x182.reshape(N, C, HW)
    g3 = gamma.reshape(1, C, 1)
    b3 = beta.reshape(1, C, 1)

    num_tc, vmem_limit = _tpu_vmem_info()
    budget = int(vmem_limit * 0.85)  # headroom: gamma/beta, descriptors, misc
    hw_pad = _pad_lanes(HW)

    cblk = _pick_cblk_fused(C, N, hw_pad, itemsize, budget, num_tc)

    if cblk is not None:
        steps = C // cblk
        # Optional deeper pipelining for short grids with two big input streams.
        base = N * cblk * hw_pad * (3 * 2 * itemsize + 3 * 4)
        extra = 2 * N * cblk * hw_pad * itemsize
        deepen = (3 <= steps <= 8) and (base + extra <= budget)

        def big_spec():
            if deepen:
                return pl.BlockSpec((N, cblk, HW), lambda j: (0, j, 0),
                                    pipeline_mode=pl.Buffered(3))
            return pl.BlockSpec((N, cblk, HW), lambda j: (0, j, 0))

        out3 = pl.pallas_call(
            functools.partial(_bn_add_fused_kernel, eps=eps),
            out_shape=jax.ShapeDtypeStruct((N, C, HW), dtype),
            grid=(steps,),
            in_specs=[
                big_spec(),   # x
                big_spec(),   # residual
                pl.BlockSpec((1, cblk, 1), lambda j: (0, j, 0)),  # gamma
                pl.BlockSpec((1, cblk, 1), lambda j: (0, j, 0)),  # beta
            ],
            out_specs=pl.BlockSpec((N, cblk, HW), lambda j: (0, j, 0)),
            compiler_params=pltpu.CompilerParams(
                dimension_semantics=("parallel",),
                vmem_limit_bytes=vmem_limit),
        )(x3, r3, g3, b3)
        return out3.reshape(N, C, H, W)

    # ---- Two-pass HW-tiled fallback (full-HW channel tiles do not fit) ----
    cblk_s = _fallback_cblk(C, N, itemsize, budget)

    # Pass 1: per-channel s1 / s2.
    hw_blk_s = _pick_hw_blk(N, HW, cblk_s, itemsize, budget, arrays=1, temps_f32=2)
    s1, s2 = pl.pallas_call(
        functools.partial(_bn_stats_kernel, hw_total=HW, hw_blk=hw_blk_s),
        out_shape=(jax.ShapeDtypeStruct((1, C, 1), jnp.float32),
                   jax.ShapeDtypeStruct((1, C, 1), jnp.float32)),
        grid=(C // cblk_s, pl.cdiv(HW, hw_blk_s)),
        in_specs=[pl.BlockSpec((N, cblk_s, hw_blk_s), lambda j, l: (0, j, l))],
        out_specs=(pl.BlockSpec((1, cblk_s, 1), lambda j, l: (0, j, 0)),
                   pl.BlockSpec((1, cblk_s, 1), lambda j, l: (0, j, 0))),
        compiler_params=pltpu.CompilerParams(
            dimension_semantics=("parallel", "arbitrary"),
            vmem_limit_bytes=vmem_limit),
    )(x3)

    # Per-channel scale/shift (C-length math, negligible — done in plain jnp).
    m = float(N * HW)
    mean = s1 / m
    var = jnp.maximum(s2 / m - mean * mean, 0.0)
    inv_std = jax.lax.rsqrt(var + eps)
    scale = g3.astype(jnp.float32) * inv_std
    shift = b3.astype(jnp.float32) - mean * scale

    # Pass 2: normalize + add.
    hw_blk_a = _pick_hw_blk(N, HW, cblk_s, itemsize, budget, arrays=3, temps_f32=3)
    out3 = pl.pallas_call(
        _bn_apply_kernel,
        out_shape=jax.ShapeDtypeStruct((N, C, HW), dtype),
        grid=(C // cblk_s, pl.cdiv(HW, hw_blk_a)),
        in_specs=[
            pl.BlockSpec((N, cblk_s, hw_blk_a), lambda j, l: (0, j, l)),
            pl.BlockSpec((N, cblk_s, hw_blk_a), lambda j, l: (0, j, l)),
            pl.BlockSpec((1, cblk_s, 1), lambda j, l: (0, j, 0)),
            pl.BlockSpec((1, cblk_s, 1), lambda j, l: (0, j, 0)),
        ],
        out_specs=pl.BlockSpec((N, cblk_s, hw_blk_a), lambda j, l: (0, j, l)),
        compiler_params=pltpu.CompilerParams(
            dimension_semantics=("parallel", "parallel"),
            vmem_limit_bytes=vmem_limit),
    )(x3, r3, scale, shift)
    return out3.reshape(N, C, H, W)


def _reference(x189, x182, gamma, beta, eps=1e-5):
    x = x189.astype(jnp.float32)
    mean = jnp.mean(x, axis=(0, 2, 3), keepdims=True)
    var = jnp.mean((x - mean) ** 2, axis=(0, 2, 3), keepdims=True)
    y = (x - mean) / jnp.sqrt(var + eps)
    y = y * gamma.reshape(1, -1, 1, 1) + beta.reshape(1, -1, 1, 1)
    return (y + x182.astype(jnp.float32)).astype(x189.dtype)


if __name__ == "__main__":
    # Small shapes consistent with the module (original: [1, 1024, 28, 28]).
    N, C, H, W = 2, 4, 16, 16
    key = jax.random.PRNGKey(0)
    k1, k2, k3, k4 = jax.random.split(key, 4)

    x189 = jax.random.normal(k1, (N, C, H, W), dtype=jnp.float32)
    x182 = jax.random.normal(k2, (N, C, H, W), dtype=jnp.float32)
    # BatchNorm2d weight/bias shapes = (C,).
    gamma = 1.0 + 0.1 * jax.random.normal(k3, (C,), dtype=jnp.float32)
    beta = 0.1 * jax.random.normal(k4, (C,), dtype=jnp.float32)

    out = batchnorm_add(x189, x182, gamma, beta)
    out = jax.block_until_ready(out)

    ref = _reference(x189, x182, gamma, beta)
    assert out.shape == (N, C, H, W)
    assert jnp.allclose(out, ref, atol=1e-4, rtol=1e-4), "mismatch vs reference"

    print("KERNEL_OK")
</pallas_src>

<mosaic_0001>
module attributes {stable_mosaic.version = 11 : i64} {
  func.func @_bn_add_fused_kernel(%arg0: i32, %arg1: memref<2x4x256xf32, #tpu.memory_space<vmem>>, %arg2: memref<2x4x256xf32, #tpu.memory_space<vmem>>, %arg3: memref<1x4x1xf32, #tpu.memory_space<vmem>>, %arg4: memref<1x4x1xf32, #tpu.memory_space<vmem>>, %arg5: memref<2x4x256xf32, #tpu.memory_space<vmem>>) attributes {dimension_semantics = [#tpu.dimension_semantics<parallel>], iteration_bounds = array<i64: 1>, scalar_prefetch = 0 : i64, scratch_operands = 0 : i64, tpu.core_type = #tpu.core_type<tc>, window_params = [{transform_indices = @transform_0, window_bounds = array<i64: 2, 4, 256>}, {transform_indices = @transform_1, window_bounds = array<i64: 2, 4, 256>}, {transform_indices = @transform_2, window_bounds = array<i64: 1, 4, 1>}, {transform_indices = @transform_3, window_bounds = array<i64: 1, 4, 1>}, {transform_indices = @transform_4, window_bounds = array<i64: 2, 4, 256>}]} {
    %c0 = arith.constant 0 : index
    %c0_0 = arith.constant 0 : index
    %c0_1 = arith.constant 0 : index
    %0 = vector.load %arg1[%c0, %c0_0, %c0_1] : memref<2x4x256xf32, #tpu.memory_space<vmem>>, vector<2x4x256xf32>
    %cst = arith.constant dense<0.000000e+00> : vector<4xf32>
    %1 = vector.multi_reduction <add>, %0, %cst [0, 2] : vector<2x4x256xf32> to vector<4xf32>
    %2 = vector.shape_cast %1 : vector<4xf32> to vector<1x4x1xf32>
    %3 = arith.mulf %0, %0 : vector<2x4x256xf32>
    %cst_2 = arith.constant dense<0.000000e+00> : vector<4xf32>
    %4 = vector.multi_reduction <add>, %3, %cst_2 [0, 2] : vector<2x4x256xf32> to vector<4xf32>
    %5 = vector.shape_cast %4 : vector<4xf32> to vector<1x4x1xf32>
    %cst_3 = arith.constant 0.001953125 : f32
    %6 = vector.broadcast %cst_3 : f32 to vector<1x4x1xf32>
    %7 = arith.mulf %2, %6 : vector<1x4x1xf32>
    %cst_4 = arith.constant 0.001953125 : f32
    %8 = vector.broadcast %cst_4 : f32 to vector<1x4x1xf32>
    %9 = arith.mulf %5, %8 : vector<1x4x1xf32>
    %10 = arith.mulf %7, %7 : vector<1x4x1xf32>
    %11 = arith.subf %9, %10 : vector<1x4x1xf32>
    %cst_5 = arith.constant 0.000000e+00 : f32
    %12 = vector.broadcast %cst_5 : f32 to vector<1x4x1xf32>
    %13 = arith.maximumf %11, %12 : vector<1x4x1xf32>
    %cst_6 = arith.constant 9.99999974E-6 : f32
    %14 = vector.broadcast %cst_6 : f32 to vector<1x4x1xf32>
    %15 = arith.addf %13, %14 : vector<1x4x1xf32>
    %16 = math.rsqrt %15 : vector<1x4x1xf32>
    %c0_7 = arith.constant 0 : index
    %c0_8 = arith.constant 0 : index
    %c0_9 = arith.constant 0 : index
    %17 = vector.load %arg3[%c0_7, %c0_8, %c0_9] : memref<1x4x1xf32, #tpu.memory_space<vmem>>, vector<1x4x1xf32>
    %18 = arith.mulf %17, %16 : vector<1x4x1xf32>
    %c0_10 = arith.constant 0 : index
    %c0_11 = arith.constant 0 : index
    %c0_12 = arith.constant 0 : index
    %19 = vector.load %arg4[%c0_10, %c0_11, %c0_12] : memref<1x4x1xf32, #tpu.memory_space<vmem>>, vector<1x4x1xf32>
    %20 = arith.mulf %7, %18 : vector<1x4x1xf32>
    %21 = arith.subf %19, %20 : vector<1x4x1xf32>
    %c0_13 = arith.constant 0 : index
    %c0_14 = arith.constant 0 : index
    %c0_15 = arith.constant 0 : index
    %22 = vector.load %arg1[%c0_13, %c0_14, %c0_15] : memref<2x4x256xf32, #tpu.memory_space<vmem>>, vector<2x4x256xf32>
    %23 = vector.broadcast %18 : vector<1x4x1xf32> to vector<2x4x256xf32>
    %24 = arith.mulf %22, %23 : vector<2x4x256xf32>
    %25 = vector.broadcast %21 : vector<1x4x1xf32> to vector<2x4x256xf32>
    %26 = arith.addf %24, %25 : vector<2x4x256xf32>
    %c0_16 = arith.constant 0 : index
    %c0_17 = arith.constant 0 : index
    %c0_18 = arith.constant 0 : index
    %27 = vector.load %arg2[%c0_16, %c0_17, %c0_18] : memref<2x4x256xf32, #tpu.memory_space<vmem>>, vector<2x4x256xf32>
    %28 = arith.addf %26, %27 : vector<2x4x256xf32>
    %c0_19 = arith.constant 0 : index
    %c0_20 = arith.constant 0 : index
    %c0_21 = arith.constant 0 : index
    %29 = vector.load %arg5[%c0_19, %c0_20, %c0_21] : memref<2x4x256xf32, #tpu.memory_space<vmem>>, vector<2x4x256xf32>
    tpu.vector_store %arg5[%c0_19, %c0_20, %c0_21], %28 {strides = array<i32>} : memref<2x4x256xf32, #tpu.memory_space<vmem>>, vector<2x4x256xf32>,
    return
  }
  func.func @transform_0(%arg0: i32) -> (i32, i32, i32) {
    %c0_i32 = arith.constant 0 : i32
    %c0_i32_0 = arith.constant 0 : i32
    %c0_i32_1 = arith.constant 0 : i32
    return %c0_i32, %arg0, %c0_i32_0 : i32, i32, i32
  }
  func.func @transform_1(%arg0: i32) -> (i32, i32, i32) {
    %c0_i32 = arith.constant 0 : i32
    %c0_i32_0 = arith.constant 0 : i32
    %c0_i32_1 = arith.constant 0 : i32
    return %c0_i32, %arg0, %c0_i32_0 : i32, i32, i32
  }
  func.func @transform_2(%arg0: i32) -> (i32, i32, i32) {
    %c0_i32 = arith.constant 0 : i32
    %c0_i32_0 = arith.constant 0 : i32
    %c0_i32_1 = arith.constant 0 : i32
    return %c0_i32, %arg0, %c0_i32_0 : i32, i32, i32
  }
  func.func @transform_3(%arg0: i32) -> (i32, i32, i32) {
    %c0_i32 = arith.constant 0 : i32
    %c0_i32_0 = arith.constant 0 : i32
    %c0_i32_1 = arith.constant 0 : i32
    return %c0_i32, %arg0, %c0_i32_0 : i32, i32, i32
  }
  func.func @transform_4(%arg0: i32) -> (i32, i32, i32) {
    %c0_i32 = arith.constant 0 : i32
    %c0_i32_0 = arith.constant 0 : i32
    %c0_i32_1 = arith.constant 0 : i32
    return %c0_i32, %arg0, %c0_i32_0 : i32, i32, i32
  }
}

</mosaic_0001>

<llo_original>
// kernel: tpu_custom_call.1
$region0: #{tpu_custom_call.1}
  #allocation0 [shape = 'u32[]', space=smem, size = 0x4, offset = 0x4, fixed_abs, tag = 'smem constant byte address 0x4 - core index']
  #allocation1 [shape = 'u32[144,128]{1,0:T(1,128)}', space=vmem, size = 0x12000, scoped, tag = 'internal scratch']
  %s0 = inlined_call_operand.hbm [shape: f32[2,4,256], index: 0, kind: input, shape index: {}]
  %s1 = inlined_call_operand.hbm [shape: f32[2,4,256], index: 1, kind: input, shape index: {}]
  %s2 = inlined_call_operand.vmem [shape: f32[1,4,1], index: 2, kind: input, shape index: {}]
  %s3 = inlined_call_operand.vmem [shape: f32[1,4,1], index: 3, kind: input, shape index: {}]
  %s4 = inlined_call_operand.hbm [shape: f32[2,4,256], index: 4, kind: output, shape index: {}]
  %s5 = sld [smem:[#allocation0]]
  $region34: #{tpu_custom_call.1} parent=0
    _
  %s7 = ssub.s32 1, %s5
  %s8 = scalar_select 0, %s7, %s5
  $region1: #{tpu_custom_call.1} parent=0
    #allocation2 [shape = 'u8[8192]{0}', space=vmem, size = 0x2000, scoped, tag = 'input window, operand 0, single buffered']
    #allocation3 [shape = 's32[1]{0}', space=sflag, size = 0x4, scoped, tag = 'scoped memory for tpu_custom_call.1']
    #allocation4 [shape = 's32[1]{0}', space=sflag, size = 0x4, scoped, tag = 'scoped memory for tpu_custom_call.1']
    #allocation5 [shape = 'u8[8192]{0}', space=vmem, size = 0x2000, scoped, tag = 'input window, operand 1, single buffered']
    #allocation6 [shape = 's32[1]{0}', space=sflag, size = 0x4, scoped, tag = 'scoped memory for tpu_custom_call.1']
    #allocation7 [shape = 'u8[8192]{0}', space=vmem, size = 0x2000, scoped, tag = 'output window, operand 0, single buffered']
    %9 = vsyncpa [#allocation3], 0
    %10 = vsyncpa [#allocation6], 0
    %11 = vsyncpa [#allocation4], 0
    // Predicated region
    $region2: #{tpu_custom_call.1} parent=1 // pred_check
      _
    $region3: #{tpu_custom_call.1} parent=1 // pred_check_branch
      %13 = sbr.rel (0) target = $region5
    $region4: #{tpu_custom_call.1} parent=1 // pred_region
      %s15 = ssub.s32 256, 256
      %16 = vsyncadd [#allocation3], %s15
      %s17 = sshll.u32 [#allocation2], 4
      %s18 = int_to_ptr.vmem [resolvable:$true] %s17
      %23 = dma.hbm_to_vmem [thread:$0]  %s0, 256, %s18, [#allocation3], 128, 128, 8
    $region5: #{tpu_custom_call.1} parent=1 // pred_fallthru
      _
    // Predicated region
    $region6: #{tpu_custom_call.1} parent=1 // pred_check
      _
    $region7: #{tpu_custom_call.1} parent=1 // pred_check_branch
      %25 = sbr.rel (0) target = $region9
    $region8: #{tpu_custom_call.1} parent=1 // pred_region
      %s27 = ssub.s32 256, 256
      %28 = vsyncadd [#allocation6], %s27
      %s29 = sshll.u32 [#allocation5], 4
      %s30 = int_to_ptr.vmem [resolvable:$true] %s29
      %35 = dma.hbm_to_vmem [thread:$0]  %s1, 256, %s30, [#allocation6], 128, 128, 8
    $region9: #{tpu_custom_call.1} parent=1 // pred_fallthru
      _
    // Predicated region
    $region10: #{tpu_custom_call.1} parent=1 // pred_check
      _
    $region11: #{tpu_custom_call.1} parent=1 // pred_check_branch
      %37 = sbr.rel (0) target = $region13
    $region12: #{tpu_custom_call.1} parent=1 // pred_region
      _
    $region13: #{tpu_custom_call.1} parent=1 // pred_fallthru
      _
    // Predicated region
    $region14: #{tpu_custom_call.1} parent=1 // pred_check
      _
    $region15: #{tpu_custom_call.1} parent=1 // pred_check_branch
      %39 = sbr.rel (0) target = $region17
    $region16: #{tpu_custom_call.1} parent=1 // pred_region
      _
    $region17: #{tpu_custom_call.1} parent=1 // pred_fallthru
      _
    // Predicated region
    $region18: #{tpu_custom_call.1} parent=1 // pred_check
      _
    $region19: #{tpu_custom_call.1} parent=1 // pred_check_branch
      %41 = sbr.rel (0) target = $region21
    $region20: #{tpu_custom_call.1} parent=1 // pred_region
      %42 = dma.done [#allocation3], 256
    $region21: #{tpu_custom_call.1} parent=1 // pred_fallthru
      _
    // Predicated region
    $region22: #{tpu_custom_call.1} parent=1 // pred_check
      _
    $region23: #{tpu_custom_call.1} parent=1 // pred_check_branch
      %44 = sbr.rel (0) target = $region25
    $region24: #{tpu_custom_call.1} parent=1 // pred_region
      %45 = dma.done [#allocation6], 256
    $region25: #{tpu_custom_call.1} parent=1 // pred_fallthru
      _
    %v46 = vld [vmem:[#allocation2] sm:$0xff]
    %v47 = vld [vmem:[#allocation2 + $0x8] sm:$0xff]
    %v50 = vcombine.high %v46, %v46
    %v51 = vcombine.high %v47, %v47
    %vm54 = vcmask 1043456
    %v55 = vsel %vm54, %v46, 0.0
    %v56 = vsel %vm54, %v50, 0.0
    %v57 = vadd.f32 %v55, %v56
    %v58 = vsel %vm54, %v47, 0.0
    %v59 = vadd.f32 %v57, %v58
    %v60 = vsel %vm54, %v51, 0.0
    %v61 = vadd.f32 %v59, %v60
    %62 = vadd.xlane.f32.xlu0 %v61
    %v63 = vpop.xlane.xlu0 %62
    %v64 = vmul.f32 %v46, %v46
    %v65 = vmul.f32 %v47, %v47
    %v68 = vcombine.high %v64, %v64
    %v69 = vcombine.high %v65, %v65
    %v72 = vsel %vm54, %v64, 0.0
    %v73 = vsel %vm54, %v68, 0.0
    %v74 = vadd.f32 %v72, %v73
    %v75 = vsel %vm54, %v65, 0.0
    %v76 = vadd.f32 %v74, %v75
    %v77 = vsel %vm54, %v69, 0.0
    %v78 = vadd.f32 %v76, %v77
    %79 = vadd.xlane.f32.xlu0 %v78
    %v80 = vpop.xlane.xlu0 %79
    %v81 = vmul.f32 %v63, 0.001953125
    %v82 = vmul.f32 %v80, 0.001953125
    %v83 = vmul.f32 %v81, %v81
    %v84 = vsub.f32 %v82, %v83
    %v85 = vmax.f32 %v84, 0.0
    %v86 = vadd.f32 %v85, 1e-05
    %v87 = vrsqrt.pop %v86
    %v88 = vld [vmem:[%s2] sm:$0xf]
    %v89 = vmul.f32 %v88, %v87
    %v90 = vld [vmem:[%s3] sm:$0xf]
    %v91 = vmul.f32 %v81, %v89
    %v92 = vsub.f32 %v90, %v91
    %94 = vset.pattern.permute.xlu0 0
    %95 = vperm.xlu0 %94, %v89
    %v96 = vpop.permute.xlu0 %95
    %v98 = vunpack.c.l.s4 839922192
    %v99 = vunpack.c.0.s8 %v98
    %v100 = vlaneseq
    %v101 = vshrl.u32 %v100, 7
    %v102 = vsub.s32 %v99, %v101
    %v103 = vrot.slane %v96, %v102
    %v105 = vmul.f32 %v46, %v103
    %v106 = vmul.f32 %v47, %v103
    %108 = vset.pattern.permute.xlu0 0
    %109 = vperm.xlu0 %108, %v92
    %v110 = vpop.permute.xlu0 %109
    %v112 = vunpack.c.l.s4 839922192
    %v113 = vunpack.c.0.s8 %v112
    %v114 = vlaneseq
    %v115 = vshrl.u32 %v114, 7
    %v116 = vsub.s32 %v113, %v115
    %v117 = vrot.slane %v110, %v116
    %v119 = vadd.f32 %v105, %v117
    %v120 = vadd.f32 %v106, %v117
    %v121 = vld [vmem:[#allocation5] sm:$0xff]
    %v122 = vld [vmem:[#allocation5 + $0x8] sm:$0xff]
    %v123 = vadd.f32 %v119, %v121
    %v124 = vadd.f32 %v120, %v122
    %125 = vst [vmem:[#allocation7] sm:$0xff] %v123
    %126 = vst [vmem:[#allocation7 + $0x8] sm:$0xff] %v124
    // Predicated region
    $region26: #{tpu_custom_call.1} parent=1 // pred_check
      _
    $region27: #{tpu_custom_call.1} parent=1 // pred_check_branch
      %128 = sbr.rel (0) target = $region29
    $region28: #{tpu_custom_call.1} parent=1 // pred_region
      %s130 = ssub.s32 256, 256
      %131 = vsyncadd [#allocation4], %s130
      %s132 = sshll.u32 [#allocation7], 4
      %s133 = int_to_ptr.vmem [resolvable:$true] %s132
      %138 = dma.vmem_to_hbm [thread:$0]  %s133, 256, %s4, [#allocation4], 128, 128, 8
    $region29: #{tpu_custom_call.1} parent=1 // pred_fallthru
      _
    // Predicated region
    $region30: #{tpu_custom_call.1} parent=1 // pred_check
      _
    $region31: #{tpu_custom_call.1} parent=1 // pred_check_branch
      %140 = sbr.rel (0) target = $region33
    $region32: #{tpu_custom_call.1} parent=1 // pred_region
      %141 = dma.done [#allocation4], 256
    $region33: #{tpu_custom_call.1} parent=1 // pred_fallthru
      _
    %142 = vsyncpa [#allocation3], 1
    %143 = vsyncpa [#allocation6], 1
    %144 = vsyncpa [#allocation4], 1

</llo_original>
